<compile_context>
chip_gen: v5e
topology: v5e:2x2
jax: 0.10.0
libtpu: 0.0.40
codegen_flags: <defaults>
</compile_context>

<pallas_src>
import functools

import jax
import jax.numpy as jnp
from jax.experimental import pallas as pl
from jax.experimental.pallas import tpu as pltpu

_LANE = 128
_SUBLANE = 8


def _round_up(v, m):
    return ((v + m - 1) // m) * m


def _mlp_fused_kernel(*refs, n_layers, n_valid, n_pad, eps, last_activation):
    """Fused multi-layer Linear (+ BatchNorm1d[train] + ReLU) forward.

    refs = (x, w0, bgb0, w1, bgb1, ..., out) where bgb_i is an (8, dout_pad)
    block whose rows 0/1/2 hold bias / gamma / beta.  Everything is fully
    VMEM-resident (no grid); intermediates live as values only.
    """
    x_ref = refs[0]
    o_ref = refs[-1]

    # Row-validity mask so sublane padding never enters the BN statistics.
    if n_pad != n_valid:
        row_ids = jax.lax.broadcasted_iota(jnp.int32, (n_pad, 1), 0)
        valid = (row_ids < n_valid).astype(jnp.float32)            # (n_pad, 1)
    else:
        valid = None
    inv_n = 1.0 / float(n_valid)

    y = x_ref[...]                                                  # (n_pad, d0_pad) f32
    for i in range(n_layers):
        w = refs[1 + 2 * i][...]                                    # (din_pad, dout_pad)
        bgb = refs[2 + 2 * i][...]                                  # (8, dout_pad)
        b = bgb[0:1, :]
        y = jnp.dot(y, w, preferred_element_type=jnp.float32) + b

        if i < n_layers - 1 or last_activation:
            g = bgb[1:2, :]
            be = bgb[2:3, :]
            # Zero padded rows once; afterwards a plain sum / sum-of-squares
            # gives biased batch statistics over the real rows only.
            if valid is not None:
                y = y * valid
            mean = jnp.sum(y, axis=0, keepdims=True) * inv_n
            var = jnp.sum(y * y, axis=0, keepdims=True) * inv_n - mean * mean
            var = jnp.maximum(var, 0.0)                             # cancellation guard
            # Fold BN into one scale/shift; rsqrt runs on the EUP (free slot).
            scale = g * jax.lax.rsqrt(var + eps)
            shift = be - mean * scale
            # NOTE: padded rows become max(shift, 0) here; they are re-masked
            # before the next layer's statistics and sliced off at the end.
            y = jnp.maximum(y * scale + shift, 0.0)                 # BN + ReLU

    o_ref[...] = y.astype(o_ref.dtype)


def prepare_mlp_params(params):
    """One-time padding/packing of parameters (hoisted out of the call path).

    params: list of (w, b, gamma, beta) with w shaped (in_dim, out_dim).
    Returns a pytree reused by every mlp_forward call:
      * weights zero-padded to (din_pad, dout_pad) with 128-lane feature dims,
      * (b, gamma, beta) packed into one (8, dout_pad) block per layer
        (rows 0/1/2; remaining rows zero).
    """
    dims = [params[0][0].shape[0]] + [w.shape[1] for (w, _, _, _) in params]
    dims_pad = [_round_up(d, _LANE) for d in dims]

    layers = []
    for i, (w, b, g, be) in enumerate(params):
        din, dout = dims[i], dims[i + 1]
        dinp, doutp = dims_pad[i], dims_pad[i + 1]
        w_p = jnp.zeros((dinp, doutp), jnp.float32).at[:din, :dout].set(w)
        bgb = jnp.zeros((_SUBLANE, doutp), jnp.float32)
        bgb = bgb.at[0, :dout].set(jnp.reshape(b, (-1,)))
        bgb = bgb.at[1, :dout].set(jnp.reshape(g, (-1,)))
        bgb = bgb.at[2, :dout].set(jnp.reshape(be, (-1,)))
        layers.append((w_p, bgb))

    return {"layers": layers, "dims": dims, "dims_pad": dims_pad}


def mlp_forward(x, prepared, last_activation=True, eps=1e-5):
    """Run the whole MLP in a single fused Pallas kernel.

    `prepared` comes from prepare_mlp_params(); the only per-call wrapper work
    is zero-padding the activations to (8k, 128k).
    """
    dims = prepared["dims"]
    dims_pad = prepared["dims_pad"]
    layers = prepared["layers"]
    n_layers = len(layers)

    n, d0 = x.shape
    assert d0 == dims[0], f"expected input dim {dims[0]}, got {d0}"

    n_pad = _round_up(max(n, _SUBLANE), _SUBLANE)
    x_p = jnp.zeros((n_pad, dims_pad[0]), jnp.float32).at[:n, :d0].set(x)

    operands = [x_p]
    for (w_p, bgb) in layers:
        operands += [w_p, bgb]

    full = lambda shape: pl.BlockSpec(shape, lambda: (0,) * len(shape))
    in_specs = [full(op.shape) for op in operands]
    out_shape = jax.ShapeDtypeStruct((n_pad, dims_pad[-1]), jnp.float32)

    flops = sum(2 * n_pad * dims_pad[i] * dims_pad[i + 1] for i in range(n_layers))
    transcendentals = sum(dims_pad[i + 1] for i in range(n_layers)
                          if i < n_layers - 1 or last_activation)
    bytes_accessed = sum(int(op.size) * 4 for op in operands) + n_pad * dims_pad[-1] * 4

    kernel = functools.partial(
        _mlp_fused_kernel, n_layers=n_layers, n_valid=n, n_pad=n_pad,
        eps=eps, last_activation=last_activation)

    out_p = pl.pallas_call(
        kernel,
        out_shape=out_shape,
        in_specs=in_specs,
        out_specs=full((n_pad, dims_pad[-1])),
        compiler_params=pltpu.CompilerParams(vmem_limit_bytes=32 * 1024 * 1024),
        cost_estimate=pl.CostEstimate(
            flops=flops, transcendentals=transcendentals,
            bytes_accessed=bytes_accessed),
    )(*operands)

    return out_p[:n, :dims[-1]]


def init_mlp_params(key, hidden_size):
    """PyTorch-style init: Linear U(-1/sqrt(fan_in), +), BN gamma=1, beta=0."""
    params = []
    for i in range(len(hidden_size) - 1):
        in_dim, out_dim = hidden_size[i], hidden_size[i + 1]
        key, kw, kb = jax.random.split(key, 3)
        bound = 1.0 / jnp.sqrt(in_dim)
        w = jax.random.uniform(kw, (in_dim, out_dim), jnp.float32, -bound, bound)
        b = jax.random.uniform(kb, (1, out_dim), jnp.float32, -bound, bound)
        gamma = jnp.ones((1, out_dim), jnp.float32)
        beta = jnp.zeros((1, out_dim), jnp.float32)
        params.append((w, b, gamma, beta))
    return params


def mlp_reference(x, params, last_activation=True, eps=1e-5):
    """Pure-JAX reference matching PyTorch Linear + BatchNorm1d(train) + ReLU."""
    n_layers = len(params)
    for i, (w, b, gamma, beta) in enumerate(params):
        y = x @ w + b
        if (i < n_layers - 1) or last_activation:
            mean = jnp.mean(y, axis=0, keepdims=True)
            var = jnp.mean((y - mean) ** 2, axis=0, keepdims=True)
            y = (y - mean) / jnp.sqrt(var + eps)
            y = y * gamma + beta
            y = jnp.maximum(y, 0.0)
        x = y
    return x


if __name__ == "__main__":
    hidden_size = [32, 64, 32, 16]   # MLP([32, 64, 32, 16], last_activation=True)
    batch = 8

    key = jax.random.PRNGKey(0)
    key, kx = jax.random.split(key)
    x = jax.random.normal(kx, (batch, hidden_size[0]), jnp.float32)
    params = init_mlp_params(key, hidden_size)

    # One-time parameter padding/packing (reused across forward calls).
    prepared = prepare_mlp_params(params)
    prepared = jax.tree_util.tree_map(
        lambda a: jax.block_until_ready(a) if isinstance(a, jax.Array) else a,
        prepared)

    out = mlp_forward(x, prepared, last_activation=True)
    out = jax.block_until_ready(out)
    ref = mlp_reference(x, params, last_activation=True)
    assert out.shape == (batch, hidden_size[-1])
    assert jnp.allclose(out, ref, atol=1e-4, rtol=1e-4), "mismatch (last_activation=True)"

    out2 = mlp_forward(x, prepared, last_activation=False)
    out2 = jax.block_until_ready(out2)
    ref2 = mlp_reference(x, params, last_activation=False)
    assert jnp.allclose(out2, ref2, atol=1e-4, rtol=1e-4), "mismatch (last_activation=False)"

    print("KERNEL_OK")
</pallas_src>

<mosaic_0001>
module attributes {stable_mosaic.version = 11 : i64} {
  func.func @_mlp_fused_kernel(%arg0: memref<8x128xf32, #tpu.memory_space<vmem>>, %arg1: memref<128x128xf32, #tpu.memory_space<vmem>>, %arg2: memref<8x128xf32, #tpu.memory_space<vmem>>, %arg3: memref<128x128xf32, #tpu.memory_space<vmem>>, %arg4: memref<8x128xf32, #tpu.memory_space<vmem>>, %arg5: memref<128x128xf32, #tpu.memory_space<vmem>>, %arg6: memref<8x128xf32, #tpu.memory_space<vmem>>, %arg7: memref<8x128xf32, #tpu.memory_space<vmem>>) attributes {dimension_semantics = [], scalar_prefetch = 0 : i64, scratch_operands = 0 : i64, tpu.core_type = #tpu.core_type<tc>} {
    %c0 = arith.constant 0 : index
    %c0_0 = arith.constant 0 : index
    %0 = vector.load %arg0[%c0, %c0_0] : memref<8x128xf32, #tpu.memory_space<vmem>>, vector<8x128xf32>
    %c0_1 = arith.constant 0 : index
    %c0_2 = arith.constant 0 : index
    %1 = vector.load %arg1[%c0_1, %c0_2] : memref<128x128xf32, #tpu.memory_space<vmem>>, vector<128x128xf32>
    %c0_3 = arith.constant 0 : index
    %c0_4 = arith.constant 0 : index
    %2 = vector.load %arg2[%c0_3, %c0_4] : memref<8x128xf32, #tpu.memory_space<vmem>>, vector<8x128xf32>
    %3 = vector.extract_strided_slice %2 {offsets = [0, 0], sizes = [1, 128], strides = [1, 1]} : vector<8x128xf32> to vector<1x128xf32>
    %cst = arith.constant dense<0.000000e+00> : vector<8x128xf32>
    %4 = tpu.matmul %0, %1, %cst {dimension_numbers = #tpu.dot_dimension_numbers<[1], [0], [0], [1], [0, 0, 1, 1], [], []>} : vector<8x128xf32>, vector<128x128xf32>, vector<8x128xf32> -> vector<8x128xf32>
    %5 = vector.broadcast %3 : vector<1x128xf32> to vector<8x128xf32>
    %6 = arith.addf %4, %5 : vector<8x128xf32>
    %7 = vector.extract_strided_slice %2 {offsets = [1, 0], sizes = [1, 128], strides = [1, 1]} : vector<8x128xf32> to vector<1x128xf32>
    %8 = vector.extract_strided_slice %2 {offsets = [2, 0], sizes = [1, 128], strides = [1, 1]} : vector<8x128xf32> to vector<1x128xf32>
    %cst_5 = arith.constant dense<0.000000e+00> : vector<128xf32>
    %9 = vector.multi_reduction <add>, %6, %cst_5 [0] : vector<8x128xf32> to vector<128xf32>
    %10 = vector.shape_cast %9 : vector<128xf32> to vector<1x128xf32>
    %cst_6 = arith.constant 1.250000e-01 : f32
    %11 = vector.broadcast %cst_6 : f32 to vector<1x128xf32>
    %12 = arith.mulf %10, %11 : vector<1x128xf32>
    %13 = arith.mulf %6, %6 : vector<8x128xf32>
    %cst_7 = arith.constant dense<0.000000e+00> : vector<128xf32>
    %14 = vector.multi_reduction <add>, %13, %cst_7 [0] : vector<8x128xf32> to vector<128xf32>
    %15 = vector.shape_cast %14 : vector<128xf32> to vector<1x128xf32>
    %cst_8 = arith.constant 1.250000e-01 : f32
    %16 = vector.broadcast %cst_8 : f32 to vector<1x128xf32>
    %17 = arith.mulf %15, %16 : vector<1x128xf32>
    %18 = arith.mulf %12, %12 : vector<1x128xf32>
    %19 = arith.subf %17, %18 : vector<1x128xf32>
    %cst_9 = arith.constant 0.000000e+00 : f32
    %20 = vector.broadcast %cst_9 : f32 to vector<1x128xf32>
    %21 = arith.maximumf %19, %20 : vector<1x128xf32>
    %cst_10 = arith.constant 9.99999974E-6 : f32
    %22 = vector.broadcast %cst_10 : f32 to vector<1x128xf32>
    %23 = arith.addf %21, %22 : vector<1x128xf32>
    %24 = math.rsqrt %23 : vector<1x128xf32>
    %25 = arith.mulf %7, %24 : vector<1x128xf32>
    %26 = arith.mulf %12, %25 : vector<1x128xf32>
    %27 = arith.subf %8, %26 : vector<1x128xf32>
    %28 = vector.broadcast %25 : vector<1x128xf32> to vector<8x128xf32>
    %29 = arith.mulf %6, %28 : vector<8x128xf32>
    %30 = vector.broadcast %27 : vector<1x128xf32> to vector<8x128xf32>
    %31 = arith.addf %29, %30 : vector<8x128xf32>
    %cst_11 = arith.constant 0.000000e+00 : f32
    %32 = vector.broadcast %cst_11 : f32 to vector<8x128xf32>
    %33 = arith.maximumf %31, %32 : vector<8x128xf32>
    %c0_12 = arith.constant 0 : index
    %c0_13 = arith.constant 0 : index
    %34 = vector.load %arg3[%c0_12, %c0_13] : memref<128x128xf32, #tpu.memory_space<vmem>>, vector<128x128xf32>
    %c0_14 = arith.constant 0 : index
    %c0_15 = arith.constant 0 : index
    %35 = vector.load %arg4[%c0_14, %c0_15] : memref<8x128xf32, #tpu.memory_space<vmem>>, vector<8x128xf32>
    %36 = vector.extract_strided_slice %35 {offsets = [0, 0], sizes = [1, 128], strides = [1, 1]} : vector<8x128xf32> to vector<1x128xf32>
    %cst_16 = arith.constant dense<0.000000e+00> : vector<8x128xf32>
    %37 = tpu.matmul %33, %34, %cst_16 {dimension_numbers = #tpu.dot_dimension_numbers<[1], [0], [0], [1], [0, 0, 1, 1], [], []>} : vector<8x128xf32>, vector<128x128xf32>, vector<8x128xf32> -> vector<8x128xf32>
    %38 = vector.broadcast %36 : vector<1x128xf32> to vector<8x128xf32>
    %39 = arith.addf %37, %38 : vector<8x128xf32>
    %40 = vector.extract_strided_slice %35 {offsets = [1, 0], sizes = [1, 128], strides = [1, 1]} : vector<8x128xf32> to vector<1x128xf32>
    %41 = vector.extract_strided_slice %35 {offsets = [2, 0], sizes = [1, 128], strides = [1, 1]} : vector<8x128xf32> to vector<1x128xf32>
    %cst_17 = arith.constant dense<0.000000e+00> : vector<128xf32>
    %42 = vector.multi_reduction <add>, %39, %cst_17 [0] : vector<8x128xf32> to vector<128xf32>
    %43 = vector.shape_cast %42 : vector<128xf32> to vector<1x128xf32>
    %cst_18 = arith.constant 1.250000e-01 : f32
    %44 = vector.broadcast %cst_18 : f32 to vector<1x128xf32>
    %45 = arith.mulf %43, %44 : vector<1x128xf32>
    %46 = arith.mulf %39, %39 : vector<8x128xf32>
    %cst_19 = arith.constant dense<0.000000e+00> : vector<128xf32>
    %47 = vector.multi_reduction <add>, %46, %cst_19 [0] : vector<8x128xf32> to vector<128xf32>
    %48 = vector.shape_cast %47 : vector<128xf32> to vector<1x128xf32>
    %cst_20 = arith.constant 1.250000e-01 : f32
    %49 = vector.broadcast %cst_20 : f32 to vector<1x128xf32>
    %50 = arith.mulf %48, %49 : vector<1x128xf32>
    %51 = arith.mulf %45, %45 : vector<1x128xf32>
    %52 = arith.subf %50, %51 : vector<1x128xf32>
    %cst_21 = arith.constant 0.000000e+00 : f32
    %53 = vector.broadcast %cst_21 : f32 to vector<1x128xf32>
    %54 = arith.maximumf %52, %53 : vector<1x128xf32>
    %cst_22 = arith.constant 9.99999974E-6 : f32
    %55 = vector.broadcast %cst_22 : f32 to vector<1x128xf32>
    %56 = arith.addf %54, %55 : vector<1x128xf32>
    %57 = math.rsqrt %56 : vector<1x128xf32>
    %58 = arith.mulf %40, %57 : vector<1x128xf32>
    %59 = arith.mulf %45, %58 : vector<1x128xf32>
    %60 = arith.subf %41, %59 : vector<1x128xf32>
    %61 = vector.broadcast %58 : vector<1x128xf32> to vector<8x128xf32>
    %62 = arith.mulf %39, %61 : vector<8x128xf32>
    %63 = vector.broadcast %60 : vector<1x128xf32> to vector<8x128xf32>
    %64 = arith.addf %62, %63 : vector<8x128xf32>
    %cst_23 = arith.constant 0.000000e+00 : f32
    %65 = vector.broadcast %cst_23 : f32 to vector<8x128xf32>
    %66 = arith.maximumf %64, %65 : vector<8x128xf32>
    %c0_24 = arith.constant 0 : index
    %c0_25 = arith.constant 0 : index
    %67 = vector.load %arg5[%c0_24, %c0_25] : memref<128x128xf32, #tpu.memory_space<vmem>>, vector<128x128xf32>
    %c0_26 = arith.constant 0 : index
    %c0_27 = arith.constant 0 : index
    %68 = vector.load %arg6[%c0_26, %c0_27] : memref<8x128xf32, #tpu.memory_space<vmem>>, vector<8x128xf32>
    %69 = vector.extract_strided_slice %68 {offsets = [0, 0], sizes = [1, 128], strides = [1, 1]} : vector<8x128xf32> to vector<1x128xf32>
    %cst_28 = arith.constant dense<0.000000e+00> : vector<8x128xf32>
    %70 = tpu.matmul %66, %67, %cst_28 {dimension_numbers = #tpu.dot_dimension_numbers<[1], [0], [0], [1], [0, 0, 1, 1], [], []>} : vector<8x128xf32>, vector<128x128xf32>, vector<8x128xf32> -> vector<8x128xf32>
    %71 = vector.broadcast %69 : vector<1x128xf32> to vector<8x128xf32>
    %72 = arith.addf %70, %71 : vector<8x128xf32>
    %73 = vector.extract_strided_slice %68 {offsets = [1, 0], sizes = [1, 128], strides = [1, 1]} : vector<8x128xf32> to vector<1x128xf32>
    %74 = vector.extract_strided_slice %68 {offsets = [2, 0], sizes = [1, 128], strides = [1, 1]} : vector<8x128xf32> to vector<1x128xf32>
    %cst_29 = arith.constant dense<0.000000e+00> : vector<128xf32>
    %75 = vector.multi_reduction <add>, %72, %cst_29 [0] : vector<8x128xf32> to vector<128xf32>
    %76 = vector.shape_cast %75 : vector<128xf32> to vector<1x128xf32>
    %cst_30 = arith.constant 1.250000e-01 : f32
    %77 = vector.broadcast %cst_30 : f32 to vector<1x128xf32>
    %78 = arith.mulf %76, %77 : vector<1x128xf32>
    %79 = arith.mulf %72, %72 : vector<8x128xf32>
    %cst_31 = arith.constant dense<0.000000e+00> : vector<128xf32>
    %80 = vector.multi_reduction <add>, %79, %cst_31 [0] : vector<8x128xf32> to vector<128xf32>
    %81 = vector.shape_cast %80 : vector<128xf32> to vector<1x128xf32>
    %cst_32 = arith.constant 1.250000e-01 : f32
    %82 = vector.broadcast %cst_32 : f32 to vector<1x128xf32>
    %83 = arith.mulf %81, %82 : vector<1x128xf32>
    %84 = arith.mulf %78, %78 : vector<1x128xf32>
    %85 = arith.subf %83, %84 : vector<1x128xf32>
    %cst_33 = arith.constant 0.000000e+00 : f32
    %86 = vector.broadcast %cst_33 : f32 to vector<1x128xf32>
    %87 = arith.maximumf %85, %86 : vector<1x128xf32>
    %cst_34 = arith.constant 9.99999974E-6 : f32
    %88 = vector.broadcast %cst_34 : f32 to vector<1x128xf32>
    %89 = arith.addf %87, %88 : vector<1x128xf32>
    %90 = math.rsqrt %89 : vector<1x128xf32>
    %91 = arith.mulf %73, %90 : vector<1x128xf32>
    %92 = arith.mulf %78, %91 : vector<1x128xf32>
    %93 = arith.subf %74, %92 : vector<1x128xf32>
    %94 = vector.broadcast %91 : vector<1x128xf32> to vector<8x128xf32>
    %95 = arith.mulf %72, %94 : vector<8x128xf32>
    %96 = vector.broadcast %93 : vector<1x128xf32> to vector<8x128xf32>
    %97 = arith.addf %95, %96 : vector<8x128xf32>
    %cst_35 = arith.constant 0.000000e+00 : f32
    %98 = vector.broadcast %cst_35 : f32 to vector<8x128xf32>
    %99 = arith.maximumf %97, %98 : vector<8x128xf32>
    %c0_36 = arith.constant 0 : index
    %c0_37 = arith.constant 0 : index
    %100 = vector.load %arg7[%c0_36, %c0_37] : memref<8x128xf32, #tpu.memory_space<vmem>>, vector<8x128xf32>
    tpu.vector_store %arg7[%c0_36, %c0_37], %99 {strides = array<i32>} : memref<8x128xf32, #tpu.memory_space<vmem>>, vector<8x128xf32>,
    return
  }
}

</mosaic_0001>

<llo_original>
// kernel: tpu_custom_call.1
$region0: #{tpu_custom_call.1}
  #allocation0 [shape = 'u32[]', space=smem, size = 0x4, offset = 0x4, fixed_abs, tag = 'smem constant byte address 0x4 - core index']
  #allocation1 [shape = 'u32[72,128]{1,0:T(1,128)}', space=vmem, size = 0x9000, scoped, tag = 'internal scratch']
  %s0 = inlined_call_operand.hbm [shape: f32[8,128], index: 0, kind: input, shape index: {}]
  %s1 = inlined_call_operand.hbm [shape: f32[128,128], index: 1, kind: input, shape index: {}]
  %s2 = inlined_call_operand.hbm [shape: f32[8,128], index: 2, kind: input, shape index: {}]
  %s3 = inlined_call_operand.hbm [shape: f32[128,128], index: 3, kind: input, shape index: {}]
  %s4 = inlined_call_operand.hbm [shape: f32[8,128], index: 4, kind: input, shape index: {}]
  %s5 = inlined_call_operand.hbm [shape: f32[128,128], index: 5, kind: input, shape index: {}]
  %s6 = inlined_call_operand.hbm [shape: f32[8,128], index: 6, kind: input, shape index: {}]
  %s7 = inlined_call_operand.hbm [shape: f32[8,128], index: 7, kind: output, shape index: {}]
  %s8 = sld [smem:[#allocation0]]
  $region66: #{tpu_custom_call.1} parent=0
    _
  %s10 = ssub.s32 1, %s8
  %s11 = scalar_select 0, %s10, %s8
  $region1: #{tpu_custom_call.1} parent=0
    #allocation2 [shape = 'u8[4096]{0}', space=vmem, size = 0x1000, scoped, tag = 'input window, operand 0, single buffered']
    #allocation3 [shape = 's32[1]{0}', space=sflag, size = 0x4, scoped, tag = 'scoped memory for tpu_custom_call.1']
    #allocation4 [shape = 's32[1]{0}', space=sflag, size = 0x4, scoped, tag = 'scoped memory for tpu_custom_call.1']
    #allocation5 [shape = 'u8[65536]{0}', space=vmem, size = 0x10000, scoped, tag = 'input window, operand 1, single buffered']
    #allocation6 [shape = 's32[1]{0}', space=sflag, size = 0x4, scoped, tag = 'scoped memory for tpu_custom_call.1']
    #allocation7 [shape = 'u8[4096]{0}', space=vmem, size = 0x1000, scoped, tag = 'input window, operand 2, single buffered']
    #allocation8 [shape = 'u8[65536]{0}', space=vmem, size = 0x10000, scoped, tag = 'input window, operand 3, single buffered']
    #allocation9 [shape = 's32[1]{0}', space=sflag, size = 0x4, scoped, tag = 'scoped memory for tpu_custom_call.1']
    #allocation10 [shape = 'u8[4096]{0}', space=vmem, size = 0x1000, scoped, tag = 'input window, operand 4, single buffered']
    #allocation11 [shape = 'u8[65536]{0}', space=vmem, size = 0x10000, scoped, tag = 'input window, operand 5, single buffered']
    #allocation12 [shape = 's32[1]{0}', space=sflag, size = 0x4, scoped, tag = 'scoped memory for tpu_custom_call.1']
    #allocation13 [shape = 'u8[4096]{0}', space=vmem, size = 0x1000, scoped, tag = 'input window, operand 6, single buffered']
    #allocation14 [shape = 'u8[4096]{0}', space=vmem, size = 0x1000, scoped, tag = 'output window, operand 0, single buffered']
    %12 = vsyncpa [#allocation3], 0
    %13 = vsyncpa [#allocation6], 0
    %14 = vsyncpa [#allocation9], 0
    %15 = vsyncpa [#allocation12], 0
    %16 = vsyncpa [#allocation4], 0
    // Predicated region
    $region2: #{tpu_custom_call.1} parent=1 // pred_check
      _
    $region3: #{tpu_custom_call.1} parent=1 // pred_check_branch
      %18 = sbr.rel (0) target = $region5
    $region4: #{tpu_custom_call.1} parent=1 // pred_region
      %20 = vsyncadd [#allocation3], 0
      %s22 = sshll.u32 %s0, 4
      %s23 = int_to_ptr.hbm [resolvable:$true] %s22
      %s24 = sshll.u32 [#allocation2], 4
      %s25 = int_to_ptr.vmem [resolvable:$true] %s24
      %27 = dma.hbm_to_vmem [thread:$0]  %s23, 128, %s25, [#allocation3]
    $region5: #{tpu_custom_call.1} parent=1 // pred_fallthru
      _
    // Predicated region
    $region6: #{tpu_custom_call.1} parent=1 // pred_check
      _
    $region7: #{tpu_custom_call.1} parent=1 // pred_check_branch
      %29 = sbr.rel (0) target = $region9
    $region8: #{tpu_custom_call.1} parent=1 // pred_region
      %31 = vsyncadd [#allocation6], 0
      %s32 = sshll.u32 %s1, 4
      %s33 = int_to_ptr.hbm [resolvable:$true] %s32
      %s34 = sshll.u32 [#allocation5], 4
      %s35 = int_to_ptr.vmem [resolvable:$true] %s34
      %40 = dma.hbm_to_vmem [thread:$0]  %s33, 2048, %s35, [#allocation6], 128, 128, 8
    $region9: #{tpu_custom_call.1} parent=1 // pred_fallthru
      _
    // Predicated region
    $region10: #{tpu_custom_call.1} parent=1 // pred_check
      _
    $region11: #{tpu_custom_call.1} parent=1 // pred_check_branch
      %42 = sbr.rel (0) target = $region13
    $region12: #{tpu_custom_call.1} parent=1 // pred_region
      %44 = vsyncadd [#allocation6], 0
      %s46 = sshll.u32 %s2, 4
      %s47 = int_to_ptr.hbm [resolvable:$true] %s46
      %s48 = sshll.u32 [#allocation7], 4
      %s49 = int_to_ptr.vmem [resolvable:$true] %s48
      %51 = dma.hbm_to_vmem [thread:$0]  %s47, 128, %s49, [#allocation6]
    $region13: #{tpu_custom_call.1} parent=1 // pred_fallthru
      _
    // Predicated region
    $region14: #{tpu_custom_call.1} parent=1 // pred_check
      _
    $region15: #{tpu_custom_call.1} parent=1 // pred_check_branch
      %53 = sbr.rel (0) target = $region17
    $region16: #{tpu_custom_call.1} parent=1 // pred_region
      %55 = vsyncadd [#allocation9], 0
      %s56 = sshll.u32 %s3, 4
      %s57 = int_to_ptr.hbm [resolvable:$true] %s56
      %s58 = sshll.u32 [#allocation8], 4
      %s59 = int_to_ptr.vmem [resolvable:$true] %s58
      %64 = dma.hbm_to_vmem [thread:$0]  %s57, 2048, %s59, [#allocation9], 128, 128, 8
    $region17: #{tpu_custom_call.1} parent=1 // pred_fallthru
      _
    // Predicated region
    $region18: #{tpu_custom_call.1} parent=1 // pred_check
      _
    $region19: #{tpu_custom_call.1} parent=1 // pred_check_branch
      %66 = sbr.rel (0) target = $region21
    $region20: #{tpu_custom_call.1} parent=1 // pred_region
      %68 = vsyncadd [#allocation9], 0
      %s70 = sshll.u32 %s4, 4
      %s71 = int_to_ptr.hbm [resolvable:$true] %s70
      %s72 = sshll.u32 [#allocation10], 4
      %s73 = int_to_ptr.vmem [resolvable:$true] %s72
      %75 = dma.hbm_to_vmem [thread:$0]  %s71, 128, %s73, [#allocation9]
    $region21: #{tpu_custom_call.1} parent=1 // pred_fallthru
      _
    // Predicated region
    $region22: #{tpu_custom_call.1} parent=1 // pred_check
      _
    $region23: #{tpu_custom_call.1} parent=1 // pred_check_branch
      %77 = sbr.rel (0) target = $region25
    $region24: #{tpu_custom_call.1} parent=1 // pred_region
      %79 = vsyncadd [#allocation12], 0
      %s80 = sshll.u32 %s5, 4
      %s81 = int_to_ptr.hbm [resolvable:$true] %s80
      %s82 = sshll.u32 [#allocation11], 4
      %s83 = int_to_ptr.vmem [resolvable:$true] %s82
      %88 = dma.hbm_to_vmem [thread:$0]  %s81, 2048, %s83, [#allocation12], 128, 128, 8
    $region25: #{tpu_custom_call.1} parent=1 // pred_fallthru
      _
    // Predicated region
    $region26: #{tpu_custom_call.1} parent=1 // pred_check
      _
    $region27: #{tpu_custom_call.1} parent=1 // pred_check_branch
      %90 = sbr.rel (0) target = $region29
    $region28: #{tpu_custom_call.1} parent=1 // pred_region
      %92 = vsyncadd [#allocation12], 0
      %s94 = sshll.u32 %s6, 4
      %s95 = int_to_ptr.hbm [resolvable:$true] %s94
      %s96 = sshll.u32 [#allocation13], 4
      %s97 = int_to_ptr.vmem [resolvable:$true] %s96
      %99 = dma.hbm_to_vmem [thread:$0]  %s95, 128, %s97, [#allocation12]
    $region29: #{tpu_custom_call.1} parent=1 // pred_fallthru
      _
    // Predicated region
    $region30: #{tpu_custom_call.1} parent=1 // pred_check
      _
    $region31: #{tpu_custom_call.1} parent=1 // pred_check_branch
      %101 = sbr.rel (0) target = $region33
    $region32: #{tpu_custom_call.1} parent=1 // pred_region
      %103 = dma.done [#allocation3], 128
    $region33: #{tpu_custom_call.1} parent=1 // pred_fallthru
      _
    // Predicated region
    $region34: #{tpu_custom_call.1} parent=1 // pred_check
      _
    $region35: #{tpu_custom_call.1} parent=1 // pred_check_branch
      %105 = sbr.rel (0) target = $region37
    $region36: #{tpu_custom_call.1} parent=1 // pred_region
      %107 = dma.done [#allocation6], 2048
    $region37: #{tpu_custom_call.1} parent=1 // pred_fallthru
      _
    // Predicated region
    $region38: #{tpu_custom_call.1} parent=1 // pred_check
      _
    $region39: #{tpu_custom_call.1} parent=1 // pred_check_branch
      %109 = sbr.rel (0) target = $region41
    $region40: #{tpu_custom_call.1} parent=1 // pred_region
      %111 = dma.done [#allocation6], 128
    $region41: #{tpu_custom_call.1} parent=1 // pred_fallthru
      _
    // Predicated region
    $region42: #{tpu_custom_call.1} parent=1 // pred_check
      _
    $region43: #{tpu_custom_call.1} parent=1 // pred_check_branch
      %113 = sbr.rel (0) target = $region45
    $region44: #{tpu_custom_call.1} parent=1 // pred_region
      %115 = dma.done [#allocation9], 2048
    $region45: #{tpu_custom_call.1} parent=1 // pred_fallthru
      _
    // Predicated region
    $region46: #{tpu_custom_call.1} parent=1 // pred_check
      _
    $region47: #{tpu_custom_call.1} parent=1 // pred_check_branch
      %117 = sbr.rel (0) target = $region49
    $region48: #{tpu_custom_call.1} parent=1 // pred_region
      %119 = dma.done [#allocation9], 128
    $region49: #{tpu_custom_call.1} parent=1 // pred_fallthru
      _
    // Predicated region
    $region50: #{tpu_custom_call.1} parent=1 // pred_check
      _
    $region51: #{tpu_custom_call.1} parent=1 // pred_check_branch
      %121 = sbr.rel (0) target = $region53
    $region52: #{tpu_custom_call.1} parent=1 // pred_region
      %123 = dma.done [#allocation12], 2048
    $region53: #{tpu_custom_call.1} parent=1 // pred_fallthru
      _
    // Predicated region
    $region54: #{tpu_custom_call.1} parent=1 // pred_check
      _
    $region55: #{tpu_custom_call.1} parent=1 // pred_check_branch
      %125 = sbr.rel (0) target = $region57
    $region56: #{tpu_custom_call.1} parent=1 // pred_region
      %127 = dma.done [#allocation12], 128
    $region57: #{tpu_custom_call.1} parent=1 // pred_fallthru
      _
    %v128 = vld [vmem:[#allocation2] sm:$0xff]
    %v129 = vld [vmem:[#allocation5] sm:$0xff]
    %v130 = vld [vmem:[#allocation5 + $0x8] sm:$0xff]
    %v131 = vld [vmem:[#allocation5 + $0x10] sm:$0xff]
    %v132 = vld [vmem:[#allocation5 + $0x18] sm:$0xff]
    %v133 = vld [vmem:[#allocation5 + $0x20] sm:$0xff]
    %v134 = vld [vmem:[#allocation5 + $0x28] sm:$0xff]
    %v135 = vld [vmem:[#allocation5 + $0x30] sm:$0xff]
    %v136 = vld [vmem:[#allocation5 + $0x38] sm:$0xff]
    %v137 = vld [vmem:[#allocation5 + $0x40] sm:$0xff]
    %v138 = vld [vmem:[#allocation5 + $0x48] sm:$0xff]
    %v139 = vld [vmem:[#allocation5 + $0x50] sm:$0xff]
    %v140 = vld [vmem:[#allocation5 + $0x58] sm:$0xff]
    %v141 = vld [vmem:[#allocation5 + $0x60] sm:$0xff]
    %v142 = vld [vmem:[#allocation5 + $0x68] sm:$0xff]
    %v143 = vld [vmem:[#allocation5 + $0x70] sm:$0xff]
    %v144 = vld [vmem:[#allocation5 + $0x78] sm:$0xff]
    %v145 = vld [vmem:[#allocation7] sm:$0xff]
    %v146 = vperm.slane %v145, 0
    %147 = vmatpush.msra.mxu0 %v144
    %148 = vmatpush.msra.mxu0 %v143
    %149 = vmatpush.msra.mxu0 %v142
    %150 = vmatpush.msra.mxu0 %v141
    %151 = vmatpush.msra.mxu0 %v140
    %152 = vmatpush.msra.mxu0 %v139
    %153 = vmatpush.msra.mxu0 %v138
    %154 = vmatpush.msra.mxu0 %v137
    %155 = vmatpush.msra.mxu0 %v136
    %156 = vmatpush.msra.mxu0 %v135
    %157 = vmatpush.msra.mxu0 %v134
    %158 = vmatpush.msra.mxu0 %v133
    %159 = vmatpush.msra.mxu0 %v132
    %160 = vmatpush.msra.mxu0 %v131
    %161 = vmatpush.msra.mxu0 %v130
    %162 = vmatpush.msra.mxu0 %v129
    %163 = vmatmul.f32.gmra.mxu0 %v128
    %v164 = vpop.f32.mrf.mxu0
    %v165 = vadd.f32 %v146, %v164
    %166 = vdwg.mxu0
    %v167 = vrot.slane %v165, 4
    %v168 = vadd.f32 %v165, %v167
    %v169 = vrot.slane %v168, 2
    %v170 = vadd.f32 %v168, %v169
    %v171 = vrot.slane %v170, 1
    %v172 = vadd.f32 %v170, %v171
    %v173 = vmul.f32 %v172, 0.125
    %v174 = vmul.f32 %v165, %v165
    %v175 = vrot.slane %v174, 4
    %v176 = vadd.f32 %v174, %v175
    %v177 = vrot.slane %v176, 2
    %v178 = vadd.f32 %v176, %v177
    %v179 = vrot.slane %v178, 1
    %v180 = vadd.f32 %v178, %v179
    %v181 = vmul.f32 %v180, 0.125
    %v182 = vmul.f32 %v173, %v173
    %v183 = vsub.f32 %v181, %v182
    %v184 = vmax.f32 %v183, 0.0
    %v185 = vadd.f32 %v184, 1e-05
    %v186 = vrsqrt.pop %v185
    %v187 = vmul.f32 %v186, %v185
    %v188 = vmul.f32 %v187, %v186
    %v189 = vmul.f32 0.5, %v188
    %v190 = vsub.f32 1.5, %v189
    %v191 = vmul.f32 %v186, %v190
    %vm192 = vweird.f32 %v185
    %vm193 = vweird.f32 %v186
    %vm194 = vmor %vm192, %vm193
    %v195 = vsel %vm194, %v186, %v191
    %v196 = vmul.f32 %v145, %v195
    %v197 = vmul.f32 %v173, %v196
    %v199 = vrot.slane %v197, 7
    %v201 = vsub.f32 %v145, %v199
    %v202 = vperm.slane %v196, 1
    %v203 = vmul.f32 %v165, %v202
    %v204 = vperm.slane %v201, 2
    %v205 = vadd.f32 %v203, %v204
    %v206 = vmax.f32 %v205, 0.0
    %v207 = vld [vmem:[#allocation8] sm:$0xff]
    %v208 = vld [vmem:[#allocation8 + $0x8] sm:$0xff]
    %v209 = vld [vmem:[#allocation8 + $0x10] sm:$0xff]
    %v210 = vld [vmem:[#allocation8 + $0x18] sm:$0xff]
    %v211 = vld [vmem:[#allocation8 + $0x20] sm:$0xff]
    %v212 = vld [vmem:[#allocation8 + $0x28] sm:$0xff]
    %v213 = vld [vmem:[#allocation8 + $0x30] sm:$0xff]
    %v214 = vld [vmem:[#allocation8 + $0x38] sm:$0xff]
    %v215 = vld [vmem:[#allocation8 + $0x40] sm:$0xff]
    %v216 = vld [vmem:[#allocation8 + $0x48] sm:$0xff]
    %v217 = vld [vmem:[#allocation8 + $0x50] sm:$0xff]
    %v218 = vld [vmem:[#allocation8 + $0x58] sm:$0xff]
    %v219 = vld [vmem:[#allocation8 + $0x60] sm:$0xff]
    %v220 = vld [vmem:[#allocation8 + $0x68] sm:$0xff]
    %v221 = vld [vmem:[#allocation8 + $0x70] sm:$0xff]
    %v222 = vld [vmem:[#allocation8 + $0x78] sm:$0xff]
    %v223 = vld [vmem:[#allocation10] sm:$0xff]
    %v224 = vperm.slane %v223, 0
    %225 = vmatpush.msra.mxu0 %v222
    %226 = vmatpush.msra.mxu0 %v221
    %227 = vmatpush.msra.mxu0 %v220
    %228 = vmatpush.msra.mxu0 %v219
    %229 = vmatpush.msra.mxu0 %v218
    %230 = vmatpush.msra.mxu0 %v217
    %231 = vmatpush.msra.mxu0 %v216
    %232 = vmatpush.msra.mxu0 %v215
    %233 = vmatpush.msra.mxu0 %v214
    %234 = vmatpush.msra.mxu0 %v213
    %235 = vmatpush.msra.mxu0 %v212
    %236 = vmatpush.msra.mxu0 %v211
    %237 = vmatpush.msra.mxu0 %v210
    %238 = vmatpush.msra.mxu0 %v209
    %239 = vmatpush.msra.mxu0 %v208
    %240 = vmatpush.msra.mxu0 %v207
    %241 = vmatmul.f32.gmra.mxu0 %v206
    %v242 = vpop.f32.mrf.mxu0
    %v243 = vadd.f32 %v224, %v242
    %244 = vdwg.mxu0
    %v245 = vrot.slane %v243, 4
    %v246 = vadd.f32 %v243, %v245
    %v247 = vrot.slane %v246, 2
    %v248 = vadd.f32 %v246, %v247
    %v249 = vrot.slane %v248, 1
    %v250 = vadd.f32 %v248, %v249
    %v251 = vmul.f32 %v250, 0.125
    %v252 = vmul.f32 %v243, %v243
    %v253 = vrot.slane %v252, 4
    %v254 = vadd.f32 %v252, %v253
    %v255 = vrot.slane %v254, 2
    %v256 = vadd.f32 %v254, %v255
    %v257 = vrot.slane %v256, 1
    %v258 = vadd.f32 %v256, %v257
    %v259 = vmul.f32 %v258, 0.125
    %v260 = vmul.f32 %v251, %v251
    %v261 = vsub.f32 %v259, %v260
    %v262 = vmax.f32 %v261, 0.0
    %v263 = vadd.f32 %v262, 1e-05
    %v264 = vrsqrt.pop %v263
    %v265 = vmul.f32 %v264, %v263
    %v266 = vmul.f32 %v265, %v264
    %v267 = vmul.f32 0.5, %v266
    %v268 = vsub.f32 1.5, %v267
    %v269 = vmul.f32 %v264, %v268
    %vm270 = vweird.f32 %v263
    %vm271 = vweird.f32 %v264
    %vm272 = vmor %vm270, %vm271
    %v273 = vsel %vm272, %v264, %v269
    %v274 = vmul.f32 %v223, %v273
    %v275 = vmul.f32 %v251, %v274
    %v277 = vrot.slane %v275, 7
    %v279 = vsub.f32 %v223, %v277
    %v280 = vperm.slane %v274, 1
    %v281 = vmul.f32 %v243, %v280
    %v282 = vperm.slane %v279, 2
    %v283 = vadd.f32 %v281, %v282
    %v284 = vmax.f32 %v283, 0.0
    %v285 = vld [vmem:[#allocation11] sm:$0xff]
    %v286 = vld [vmem:[#allocation11 + $0x8] sm:$0xff]
    %v287 = vld [vmem:[#allocation11 + $0x10] sm:$0xff]
    %v288 = vld [vmem:[#allocation11 + $0x18] sm:$0xff]
    %v289 = vld [vmem:[#allocation11 + $0x20] sm:$0xff]
    %v290 = vld [vmem:[#allocation11 + $0x28] sm:$0xff]
    %v291 = vld [vmem:[#allocation11 + $0x30] sm:$0xff]
    %v292 = vld [vmem:[#allocation11 + $0x38] sm:$0xff]
    %v293 = vld [vmem:[#allocation11 + $0x40] sm:$0xff]
    %v294 = vld [vmem:[#allocation11 + $0x48] sm:$0xff]
    %v295 = vld [vmem:[#allocation11 + $0x50] sm:$0xff]
    %v296 = vld [vmem:[#allocation11 + $0x58] sm:$0xff]
    %v297 = vld [vmem:[#allocation11 + $0x60] sm:$0xff]
    %v298 = vld [vmem:[#allocation11 + $0x68] sm:$0xff]
    %v299 = vld [vmem:[#allocation11 + $0x70] sm:$0xff]
    %v300 = vld [vmem:[#allocation11 + $0x78] sm:$0xff]
    %v301 = vld [vmem:[#allocation13] sm:$0xff]
    %v302 = vperm.slane %v301, 0
    %303 = vmatpush.msra.mxu0 %v300
    %304 = vmatpush.msra.mxu0 %v299
    %305 = vmatpush.msra.mxu0 %v298
    %306 = vmatpush.msra.mxu0 %v297
    %307 = vmatpush.msra.mxu0 %v296
    %308 = vmatpush.msra.mxu0 %v295
    %309 = vmatpush.msra.mxu0 %v294
    %310 = vmatpush.msra.mxu0 %v293
    %311 = vmatpush.msra.mxu0 %v292
    %312 = vmatpush.msra.mxu0 %v291
    %313 = vmatpush.msra.mxu0 %v290
    %314 = vmatpush.msra.mxu0 %v289
    %315 = vmatpush.msra.mxu0 %v288
    %316 = vmatpush.msra.mxu0 %v287
    %317 = vmatpush.msra.mxu0 %v286
    %318 = vmatpush.msra.mxu0 %v285
    %319 = vmatmul.f32.gmra.mxu0 %v284
    %v320 = vpop.f32.mrf.mxu0
    %v321 = vadd.f32 %v302, %v320
    %322 = vdwg.mxu0
    %v323 = vrot.slane %v321, 4
    %v324 = vadd.f32 %v321, %v323
    %v325 = vrot.slane %v324, 2
    %v326 = vadd.f32 %v324, %v325
    %v327 = vrot.slane %v326, 1
    %v328 = vadd.f32 %v326, %v327
    %v329 = vmul.f32 %v328, 0.125
    %v330 = vmul.f32 %v321, %v321
    %v331 = vrot.slane %v330, 4
    %v332 = vadd.f32 %v330, %v331
    %v333 = vrot.slane %v332, 2
    %v334 = vadd.f32 %v332, %v333
    %v335 = vrot.slane %v334, 1
    %v336 = vadd.f32 %v334, %v335
    %v337 = vmul.f32 %v336, 0.125
    %v338 = vmul.f32 %v329, %v329
    %v339 = vsub.f32 %v337, %v338
    %v340 = vmax.f32 %v339, 0.0
    %v341 = vadd.f32 %v340, 1e-05
    %v342 = vrsqrt.pop %v341
    %v343 = vmul.f32 %v342, %v341
    %v344 = vmul.f32 %v343, %v342
    %v345 = vmul.f32 0.5, %v344
    %v346 = vsub.f32 1.5, %v345
    %v347 = vmul.f32 %v342, %v346
    %vm348 = vweird.f32 %v341
    %vm349 = vweird.f32 %v342
    %vm350 = vmor %vm348, %vm349
    %v351 = vsel %vm350, %v342, %v347
    %v352 = vmul.f32 %v301, %v351
    %v353 = vmul.f32 %v329, %v352
    %v355 = vrot.slane %v353, 7
    %v357 = vsub.f32 %v301, %v355
    %v358 = vperm.slane %v352, 1
    %v359 = vmul.f32 %v321, %v358
    %v360 = vperm.slane %v357, 2
    %v361 = vadd.f32 %v359, %v360
    %v362 = vmax.f32 %v361, 0.0
    %363 = vst [vmem:[#allocation14] sm:$0xff] %v362
    // Predicated region
    $region58: #{tpu_custom_call.1} parent=1 // pred_check
      _
    $region59: #{tpu_custom_call.1} parent=1 // pred_check_branch
      %365 = sbr.rel (0) target = $region61
    $region60: #{tpu_custom_call.1} parent=1 // pred_region
      %367 = vsyncadd [#allocation4], 0
      %s369 = sshll.u32 [#allocation14], 4
      %s370 = int_to_ptr.vmem [resolvable:$true] %s369
      %s371 = sshll.u32 %s7, 4
      %s372 = int_to_ptr.hbm [resolvable:$true] %s371
      %374 = dma.vmem_to_hbm [thread:$0]  %s370, 128, %s372, [#allocation4]
    $region61: #{tpu_custom_call.1} parent=1 // pred_fallthru
      _
    // Predicated region
    $region62: #{tpu_custom_call.1} parent=1 // pred_check
      _
    $region63: #{tpu_custom_call.1} parent=1 // pred_check_branch
      %376 = sbr.rel (0) target = $region65
    $region64: #{tpu_custom_call.1} parent=1 // pred_region
      %378 = dma.done [#allocation4], 128
    $region65: #{tpu_custom_call.1} parent=1 // pred_fallthru
      _
    %379 = vsyncpa [#allocation3], 1
    %380 = vsyncpa [#allocation6], 1
    %381 = vsyncpa [#allocation9], 1
    %382 = vsyncpa [#allocation12], 1
    %383 = vsyncpa [#allocation4], 1

</llo_original>
